<compile_context>
chip_gen: v7x
topology: tpu7x:2x2x1
jax: 0.10.0
libtpu: 0.0.40
codegen_flags: <defaults>
</compile_context>

<pallas_src>
import functools

import jax
import jax.numpy as jnp
from jax.experimental import pallas as pl
from jax.experimental.pallas import tpu as pltpu


LANE = 128    # lane width (last-dim tiling unit)
SUBLANE = 8   # f32 sublane (second-to-last-dim tiling unit)


def _round_up(v, m):
    return ((v + m - 1) // m) * m


def _pad2(a, rows, cols):
    """Zero-pad a 2D array up to (rows, cols); no-op if already that shape."""
    pr, pc = rows - a.shape[0], cols - a.shape[1]
    if pr == 0 and pc == 0:
        return a
    return jnp.pad(a, ((0, pr), (0, pc)))


def mlp_kernel(x_ref, w1_ref, b1_ref, w2_ref, b2_ref, w3_ref, b3_ref, o_ref):
    # One batch tile per grid step.  Weights/biases are VMEM-resident (constant
    # index_map).  All lane dims are multiples of 128, so the three matmuls run
    # lane-dense on the MXU and the output store is a full-lane write.
    # Accumulation, bias add and ReLU stay in f32 even on the bf16 path.
    x = x_ref[...]

    h1 = jnp.dot(x, w1_ref[...], preferred_element_type=jnp.float32) + b1_ref[...]
    h1 = jnp.maximum(h1, 0.0)

    h2 = jnp.dot(h1.astype(w2_ref.dtype), w2_ref[...],
                 preferred_element_type=jnp.float32) + b2_ref[...]
    h2 = jnp.maximum(h2, 0.0)

    out = jnp.dot(h2.astype(w3_ref.dtype), w3_ref[...],
                  preferred_element_type=jnp.float32) + b3_ref[...]
    o_ref[...] = out.astype(o_ref.dtype)


def prepare_params(params, compute_dtype=jnp.float32):
    """One-time parameter prep (call once, outside the forward pass).

    Zero-pads every matmul dimension up to a multiple of 128 and casts the
    weights to `compute_dtype` (f32 default, bf16 opt-in).  Biases stay f32:
    they are added to the f32 MXU accumulator inside the kernel.  Zero padding
    keeps the math exact: padded weight rows/cols and bias entries are 0, so
    padded hidden activations are relu(0) = 0 and padded output columns are
    sliced off in the wrapper.
    """
    w1, b1 = params["w1"], params["b1"]
    w2, b2 = params["w2"], params["b2"]
    w3, b3 = params["w3"], params["b3"]

    d_in, h1 = w1.shape
    h2 = w2.shape[1]
    nc = w3.shape[1]
    d_in_p = _round_up(d_in, LANE)
    h1_p = _round_up(h1, LANE)
    h2_p = _round_up(h2, LANE)
    nc_p = _round_up(nc, LANE)

    return {
        "w1": _pad2(w1, d_in_p, h1_p).astype(compute_dtype),
        "b1": _pad2(b1, 1, h1_p).astype(jnp.float32),
        "w2": _pad2(w2, h1_p, h2_p).astype(compute_dtype),
        "b2": _pad2(b2, 1, h2_p).astype(jnp.float32),
        "w3": _pad2(w3, h2_p, nc_p).astype(compute_dtype),
        "b3": _pad2(b3, 1, nc_p).astype(jnp.float32),
    }


def _choose_batch_tiling(b):
    """Pick (rows, tile_b) for the batch dimension.

    rows    -- row count handed to the kernel (b, or b minimally padded to a
               multiple of 8 when b > 8 and b % 8 != 0; at most 7 extra rows).
    tile_b  -- rows per grid step.  Single full-size tile for small batches;
               for >= 256 rows, split into >= 2 tiles (each >= 128 rows, up to
               512) so v7x megacore can use both TensorCores and per-step
               overhead stays amortized.  The last tile may be ragged.
    """
    if b <= SUBLANE:
        return b, b                       # full-dim block, no padding at all
    rows = b if b % SUBLANE == 0 else _round_up(b, SUBLANE)
    if rows < 256:
        return rows, rows                 # one big tile; don't go below ~128
    half = _round_up((rows + 1) // 2, SUBLANE)
    return rows, min(512, half)


@functools.partial(jax.jit, static_argnames=("num_classes",))
def standard_mlp_forward(x, prepped, *, num_classes):
    """x: (B, C, H, W) float32 (NCHW). prepped: output of prepare_params()."""
    b = x.shape[0]
    x_flat = x.reshape(b, -1)             # nn.Flatten()
    d_in = x_flat.shape[1]

    w1, b1 = prepped["w1"], prepped["b1"]
    w2, b2 = prepped["w2"], prepped["b2"]
    w3, b3 = prepped["w3"], prepped["b3"]
    d_in_p, h1_p = w1.shape
    h2_p = w2.shape[1]
    nc_p = w3.shape[1]
    assert num_classes <= nc_p

    rows, tile_b = _choose_batch_tiling(b)

    # Only materialize a padded copy of the activations when actually required
    # (non-lane-aligned d_in, or <=7 rows to reach a sublane multiple).  In the
    # common case this is a no-op and x_flat goes straight into the kernel.
    x_in = x_flat
    if rows != b or d_in_p != d_in:
        x_in = _pad2(x_in, rows, d_in_p)
    if x_in.dtype != w1.dtype:
        x_in = x_in.astype(w1.dtype)      # bf16 opt-in path

    num_tiles = pl.cdiv(rows, tile_b)
    grid = (num_tiles,)

    # Advisory cost hint so XLA schedules the surrounding reshape/slice well.
    flops = 2 * rows * (d_in_p * h1_p + h1_p * h2_p + h2_p * nc_p)
    bytes_accessed = (
        x_in.size * x_in.dtype.itemsize
        + sum(a.size * a.dtype.itemsize for a in (w1, b1, w2, b2, w3, b3))
        + rows * nc_p * 4
    )

    out_padded = pl.pallas_call(
        mlp_kernel,
        out_shape=jax.ShapeDtypeStruct((rows, nc_p), jnp.float32),
        grid_spec=pltpu.PrefetchScalarGridSpec(
            num_scalar_prefetch=0,
            grid=grid,
            in_specs=[
                # Activations: one (tile_b, d_in_p) block per grid step
                # (auto double-buffered; next tile's DMA overlaps compute).
                pl.BlockSpec((tile_b, d_in_p), lambda i: (i, 0)),
                # Weights/biases: constant block index -> VMEM-resident.
                pl.BlockSpec((d_in_p, h1_p), lambda i: (0, 0)),
                pl.BlockSpec((1, h1_p), lambda i: (0, 0)),
                pl.BlockSpec((h1_p, h2_p), lambda i: (0, 0)),
                pl.BlockSpec((1, h2_p), lambda i: (0, 0)),
                pl.BlockSpec((h2_p, nc_p), lambda i: (0, 0)),
                pl.BlockSpec((1, nc_p), lambda i: (0, 0)),
            ],
            out_specs=pl.BlockSpec((tile_b, nc_p), lambda i: (i, 0)),
        ),
        compiler_params=pltpu.CompilerParams(
            # Batch tiles are independent -> shard across TCs on v7x megacore.
            dimension_semantics=("parallel",),
            # Explicit VMEM budget; actual need here (512x1024 f32 x-tile x2
            # buffers + out tiles + <1.5 MiB resident weights) is ~5 MiB, well
            # under v5e's 16 MiB scoped default and v7x's 32 MiB.
            vmem_limit_bytes=32 * 1024 * 1024,
        ),
        cost_estimate=pl.CostEstimate(
            flops=flops, transcendentals=0, bytes_accessed=bytes_accessed),
    )(x_in, w1, b1, w2, b2, w3, b3)

    # Strip any batch padding / ragged-tile rows and lane-padded class columns.
    return out_padded[:b, :num_classes]


def init_params(key, input_dim, hidden_sizes, num_classes):
    """Deterministic init mimicking nn.Linear default (uniform(-1/sqrt(in), 1/sqrt(in)))."""
    sizes = [input_dim] + list(hidden_sizes) + [num_classes]
    params = {}
    keys = jax.random.split(key, 2 * (len(sizes) - 1))
    for i in range(len(sizes) - 1):
        fan_in, fan_out = sizes[i], sizes[i + 1]
        bound = 1.0 / jnp.sqrt(jnp.float32(fan_in))
        # Stored pre-transposed: (in_features, out_features)
        w = jax.random.uniform(keys[2 * i], (fan_in, fan_out),
                               jnp.float32, -bound, bound)
        bvec = jax.random.uniform(keys[2 * i + 1], (1, fan_out),
                                  jnp.float32, -bound, bound)
        params[f"w{i + 1}"] = w
        params[f"b{i + 1}"] = bvec
    return params


if __name__ == "__main__":
    key = jax.random.PRNGKey(0)
    k_x, k_p, k_x2 = jax.random.split(key, 3)

    # StandardMLP(input_size=(4, 16, 16), num_classes=10, hidden_sizes=(32, 32))
    input_size = (4, 16, 16)
    hidden_sizes = (32, 32)
    num_classes = 10
    batch = 2

    input_dim = int(input_size[0] * input_size[1] * input_size[2])
    params = init_params(k_p, input_dim, hidden_sizes, num_classes)

    def ref_forward(xx):
        xf = xx.reshape(xx.shape[0], -1)
        r = jnp.maximum(xf @ params["w1"] + params["b1"], 0.0)
        r = jnp.maximum(r @ params["w2"] + params["b2"], 0.0)
        return r @ params["w3"] + params["b3"]

    # One-time parameter prep (padding / dtype cast hoisted out of the forward).
    prepped_f32 = prepare_params(params, jnp.float32)
    prepped_bf16 = prepare_params(params, jnp.bfloat16)

    # 1) Small batch, f32 (primary case).
    x = jax.random.normal(k_x, (batch,) + input_size, dtype=jnp.float32)
    out = standard_mlp_forward(x, prepped_f32, num_classes=num_classes)
    jax.block_until_ready(out)
    assert out.shape == (batch, num_classes)
    assert jnp.allclose(out, ref_forward(x), atol=1e-5, rtol=1e-5)

    # 2) Larger, non-8-multiple batch: exercises the minimal row pad, the
    #    multi-tile grid (>= 2 steps) and ragged-last-tile handling.
    xb = jax.random.normal(k_x2, (300,) + input_size, dtype=jnp.float32)
    outb = standard_mlp_forward(xb, prepped_f32, num_classes=num_classes)
    jax.block_until_ready(outb)
    assert outb.shape == (300, num_classes)
    assert jnp.allclose(outb, ref_forward(xb), atol=1e-4, rtol=1e-4)

    # 3) bf16 opt-in compute path (halves HBM traffic; relaxed tolerance since
    #    inputs/weights are bf16 while accumulation stays f32).
    outh = standard_mlp_forward(x, prepped_bf16, num_classes=num_classes)
    jax.block_until_ready(outh)
    assert outh.shape == (batch, num_classes)
    assert jnp.allclose(outh, ref_forward(x), atol=5e-2, rtol=5e-2)

    print("KERNEL_OK")
</pallas_src>

<mosaic_0001>
module attributes {stable_mosaic.version = 11 : i64} {
  func.func @mlp_kernel(%arg0: i32, %arg1: memref<2x1024xf32, #tpu.memory_space<vmem>>, %arg2: memref<1024x128xf32, #tpu.memory_space<vmem>>, %arg3: memref<1x128xf32, #tpu.memory_space<vmem>>, %arg4: memref<128x128xf32, #tpu.memory_space<vmem>>, %arg5: memref<1x128xf32, #tpu.memory_space<vmem>>, %arg6: memref<128x128xf32, #tpu.memory_space<vmem>>, %arg7: memref<1x128xf32, #tpu.memory_space<vmem>>, %arg8: memref<2x128xf32, #tpu.memory_space<vmem>>) attributes {dimension_semantics = [#tpu.dimension_semantics<parallel>], iteration_bounds = array<i64: 1>, scalar_prefetch = 0 : i64, scratch_operands = 0 : i64, tpu.core_type = #tpu.core_type<tc>, window_params = [{transform_indices = @transform_0, window_bounds = array<i64: 2, 1024>}, {pipeline_mode = #tpu.pipeline_mode<synchronous>, transform_indices = @transform_1, window_bounds = array<i64: 1024, 128>}, {pipeline_mode = #tpu.pipeline_mode<synchronous>, transform_indices = @transform_2, window_bounds = array<i64: 1, 128>}, {pipeline_mode = #tpu.pipeline_mode<synchronous>, transform_indices = @transform_3, window_bounds = array<i64: 128, 128>}, {pipeline_mode = #tpu.pipeline_mode<synchronous>, transform_indices = @transform_4, window_bounds = array<i64: 1, 128>}, {pipeline_mode = #tpu.pipeline_mode<synchronous>, transform_indices = @transform_5, window_bounds = array<i64: 128, 128>}, {pipeline_mode = #tpu.pipeline_mode<synchronous>, transform_indices = @transform_6, window_bounds = array<i64: 1, 128>}, {transform_indices = @transform_7, window_bounds = array<i64: 2, 128>}]} {
    %c0 = arith.constant 0 : index
    %c0_0 = arith.constant 0 : index
    %0 = vector.load %arg1[%c0, %c0_0] : memref<2x1024xf32, #tpu.memory_space<vmem>>, vector<2x1024xf32>
    %c0_1 = arith.constant 0 : index
    %c0_2 = arith.constant 0 : index
    %1 = vector.load %arg2[%c0_1, %c0_2] : memref<1024x128xf32, #tpu.memory_space<vmem>>, vector<1024x128xf32>
    %cst = arith.constant dense<0.000000e+00> : vector<2x128xf32>
    %2 = tpu.matmul %0, %1, %cst {dimension_numbers = #tpu.dot_dimension_numbers<[1], [0], [0], [1], [0, 0, 1, 1], [], []>} : vector<2x1024xf32>, vector<1024x128xf32>, vector<2x128xf32> -> vector<2x128xf32>
    %c0_3 = arith.constant 0 : index
    %c0_4 = arith.constant 0 : index
    %3 = vector.load %arg3[%c0_3, %c0_4] : memref<1x128xf32, #tpu.memory_space<vmem>>, vector<1x128xf32>
    %4 = vector.broadcast %3 : vector<1x128xf32> to vector<2x128xf32>
    %5 = arith.addf %2, %4 : vector<2x128xf32>
    %cst_5 = arith.constant 0.000000e+00 : f32
    %6 = vector.broadcast %cst_5 : f32 to vector<2x128xf32>
    %7 = arith.maximumf %5, %6 : vector<2x128xf32>
    %c0_6 = arith.constant 0 : index
    %c0_7 = arith.constant 0 : index
    %8 = vector.load %arg4[%c0_6, %c0_7] : memref<128x128xf32, #tpu.memory_space<vmem>>, vector<128x128xf32>
    %cst_8 = arith.constant dense<0.000000e+00> : vector<2x128xf32>
    %9 = tpu.matmul %7, %8, %cst_8 {dimension_numbers = #tpu.dot_dimension_numbers<[1], [0], [0], [1], [0, 0, 1, 1], [], []>} : vector<2x128xf32>, vector<128x128xf32>, vector<2x128xf32> -> vector<2x128xf32>
    %c0_9 = arith.constant 0 : index
    %c0_10 = arith.constant 0 : index
    %10 = vector.load %arg5[%c0_9, %c0_10] : memref<1x128xf32, #tpu.memory_space<vmem>>, vector<1x128xf32>
    %11 = vector.broadcast %10 : vector<1x128xf32> to vector<2x128xf32>
    %12 = arith.addf %9, %11 : vector<2x128xf32>
    %cst_11 = arith.constant 0.000000e+00 : f32
    %13 = vector.broadcast %cst_11 : f32 to vector<2x128xf32>
    %14 = arith.maximumf %12, %13 : vector<2x128xf32>
    %c0_12 = arith.constant 0 : index
    %c0_13 = arith.constant 0 : index
    %15 = vector.load %arg6[%c0_12, %c0_13] : memref<128x128xf32, #tpu.memory_space<vmem>>, vector<128x128xf32>
    %cst_14 = arith.constant dense<0.000000e+00> : vector<2x128xf32>
    %16 = tpu.matmul %14, %15, %cst_14 {dimension_numbers = #tpu.dot_dimension_numbers<[1], [0], [0], [1], [0, 0, 1, 1], [], []>} : vector<2x128xf32>, vector<128x128xf32>, vector<2x128xf32> -> vector<2x128xf32>
    %c0_15 = arith.constant 0 : index
    %c0_16 = arith.constant 0 : index
    %17 = vector.load %arg7[%c0_15, %c0_16] : memref<1x128xf32, #tpu.memory_space<vmem>>, vector<1x128xf32>
    %18 = vector.broadcast %17 : vector<1x128xf32> to vector<2x128xf32>
    %19 = arith.addf %16, %18 : vector<2x128xf32>
    %c0_17 = arith.constant 0 : index
    %c0_18 = arith.constant 0 : index
    %20 = vector.load %arg8[%c0_17, %c0_18] : memref<2x128xf32, #tpu.memory_space<vmem>>, vector<2x128xf32>
    tpu.vector_store %arg8[%c0_17, %c0_18], %19 {strides = array<i32>} : memref<2x128xf32, #tpu.memory_space<vmem>>, vector<2x128xf32>,
    return
  }
  func.func @transform_0(%arg0: i32) -> (i32, i32) {
    %c0_i32 = arith.constant 0 : i32
    %c0_i32_0 = arith.constant 0 : i32
    return %arg0, %c0_i32 : i32, i32
  }
  func.func @transform_1(%arg0: i32) -> (i32, i32) {
    %c0_i32 = arith.constant 0 : i32
    %c0_i32_0 = arith.constant 0 : i32
    %c0_i32_1 = arith.constant 0 : i32
    return %c0_i32, %c0_i32_0 : i32, i32
  }
  func.func @transform_2(%arg0: i32) -> (i32, i32) {
    %c0_i32 = arith.constant 0 : i32
    %c0_i32_0 = arith.constant 0 : i32
    %c0_i32_1 = arith.constant 0 : i32
    return %c0_i32, %c0_i32_0 : i32, i32
  }
  func.func @transform_3(%arg0: i32) -> (i32, i32) {
    %c0_i32 = arith.constant 0 : i32
    %c0_i32_0 = arith.constant 0 : i32
    %c0_i32_1 = arith.constant 0 : i32
    return %c0_i32, %c0_i32_0 : i32, i32
  }
  func.func @transform_4(%arg0: i32) -> (i32, i32) {
    %c0_i32 = arith.constant 0 : i32
    %c0_i32_0 = arith.constant 0 : i32
    %c0_i32_1 = arith.constant 0 : i32
    return %c0_i32, %c0_i32_0 : i32, i32
  }
  func.func @transform_5(%arg0: i32) -> (i32, i32) {
    %c0_i32 = arith.constant 0 : i32
    %c0_i32_0 = arith.constant 0 : i32
    %c0_i32_1 = arith.constant 0 : i32
    return %c0_i32, %c0_i32_0 : i32, i32
  }
  func.func @transform_6(%arg0: i32) -> (i32, i32) {
    %c0_i32 = arith.constant 0 : i32
    %c0_i32_0 = arith.constant 0 : i32
    %c0_i32_1 = arith.constant 0 : i32
    return %c0_i32, %c0_i32_0 : i32, i32
  }
  func.func @transform_7(%arg0: i32) -> (i32, i32) {
    %c0_i32 = arith.constant 0 : i32
    %c0_i32_0 = arith.constant 0 : i32
    return %arg0, %c0_i32 : i32, i32
  }
}

</mosaic_0001>

<llo_original>
// kernel: standard_mlp_forward.1
$region0: #{standard_mlp_forward.1}
  #allocation0 [shape = 'u32[]', space=smem, size = 0x4, offset = 0x4, fixed_abs, tag = 'smem constant byte address 0x4 - core index']
  #allocation1 [shape = 'u32[144,128]{1,0:T(1,128)}', space=vmem, size = 0x12000, scoped, tag = 'internal scratch']
  %s0 = inlined_call_operand.vmem [shape: f32[2,1024], index: 0, kind: input, shape index: {}]
  %s1 = inlined_call_operand.hbm [shape: f32[1024,128], index: 1, kind: input, shape index: {}]
  %s2 = inlined_call_operand.vmem [shape: f32[1,128], index: 2, kind: input, shape index: {}]
  %s3 = inlined_call_operand.vmem [shape: f32[128,128], index: 3, kind: input, shape index: {}]
  %s4 = inlined_call_operand.vmem [shape: f32[1,128], index: 4, kind: input, shape index: {}]
  %s5 = inlined_call_operand.hbm [shape: f32[128,128], index: 5, kind: input, shape index: {}]
  %s6 = inlined_call_operand.vmem [shape: f32[1,128], index: 6, kind: input, shape index: {}]
  %s7 = inlined_call_operand.hbm [shape: f32[2,128], index: 7, kind: output, shape index: {}]
  %s8 = sld [smem:[#allocation0]]
  $region46: #{standard_mlp_forward.1} parent=0
    _
  %s10 = ssub.s32 1, %s8
  %s11 = scalar_select 0, %s10, %s8
  $region1: #{standard_mlp_forward.1} parent=0
    #allocation2 [shape = 'u8[524288]{0}', space=vmem, size = 0x80000, scoped, tag = 'input window, operand 1, single buffered']
    #allocation3 [shape = 's32[1]{0}', space=sflag, size = 0x4, scoped, tag = 'scoped memory for standard_mlp_forward.1']
    #allocation4 [shape = 's32[1]{0}', space=sflag, size = 0x4, scoped, tag = 'scoped memory for standard_mlp_forward.1']
    #allocation5 [shape = 'u8[65536]{0}', space=vmem, size = 0x10000, scoped, tag = 'input window, operand 5, single buffered']
    #allocation6 [shape = 's32[1]{0}', space=sflag, size = 0x4, scoped, tag = 'scoped memory for standard_mlp_forward.1']
    #allocation7 [shape = 'u8[1024]{0}', space=vmem, size = 0x400, scoped, tag = 'output window, operand 0, single buffered']
    %12 = vsyncpa [#allocation3], 0
    %13 = vsyncpa [#allocation6], 0
    %14 = vsyncpa [#allocation4], 0
    // Predicated region
    $region2: #{standard_mlp_forward.1} parent=1 // pred_check
      _
    $region3: #{standard_mlp_forward.1} parent=1 // pred_check_branch
      %16 = sbr.rel (0) target = $region5
    $region4: #{standard_mlp_forward.1} parent=1 // pred_region
      _
    $region5: #{standard_mlp_forward.1} parent=1 // pred_fallthru
      _
    // Predicated region
    $region6: #{standard_mlp_forward.1} parent=1 // pred_check
      _
    $region7: #{standard_mlp_forward.1} parent=1 // pred_check_branch
      %18 = sbr.rel (0) target = $region9
    $region8: #{standard_mlp_forward.1} parent=1 // pred_region
      %s20 = ssub.s32 16384, 16384
      %21 = vsyncadd [#allocation3], %s20
      %s22 = sshll.u32 [#allocation2], 4
      %s23 = int_to_ptr.vmem [resolvable:$true] %s22
      %28 = dma.hbm_to_vmem [thread:$0]  %s1, 16384, %s23, [#allocation3], 128, 128, 8
    $region9: #{standard_mlp_forward.1} parent=1 // pred_fallthru
      _
    // Predicated region
    $region10: #{standard_mlp_forward.1} parent=1 // pred_check
      _
    $region11: #{standard_mlp_forward.1} parent=1 // pred_check_branch
      %30 = sbr.rel (0) target = $region13
    $region12: #{standard_mlp_forward.1} parent=1 // pred_region
      _
    $region13: #{standard_mlp_forward.1} parent=1 // pred_fallthru
      _
    // Predicated region
    $region14: #{standard_mlp_forward.1} parent=1 // pred_check
      _
    $region15: #{standard_mlp_forward.1} parent=1 // pred_check_branch
      %32 = sbr.rel (0) target = $region17
    $region16: #{standard_mlp_forward.1} parent=1 // pred_region
      _
    $region17: #{standard_mlp_forward.1} parent=1 // pred_fallthru
      _
    // Predicated region
    $region18: #{standard_mlp_forward.1} parent=1 // pred_check
      _
    $region19: #{standard_mlp_forward.1} parent=1 // pred_check_branch
      %34 = sbr.rel (0) target = $region21
    $region20: #{standard_mlp_forward.1} parent=1 // pred_region
      _
    $region21: #{standard_mlp_forward.1} parent=1 // pred_fallthru
      _
    // Predicated region
    $region22: #{standard_mlp_forward.1} parent=1 // pred_check
      _
    $region23: #{standard_mlp_forward.1} parent=1 // pred_check_branch
      %36 = sbr.rel (0) target = $region25
    $region24: #{standard_mlp_forward.1} parent=1 // pred_region
      %s38 = ssub.s32 2048, 2048
      %39 = vsyncadd [#allocation6], %s38
      %s40 = sshll.u32 [#allocation5], 4
      %s41 = int_to_ptr.vmem [resolvable:$true] %s40
      %46 = dma.hbm_to_vmem [thread:$0]  %s5, 2048, %s41, [#allocation6], 128, 128, 8
    $region25: #{standard_mlp_forward.1} parent=1 // pred_fallthru
      _
    // Predicated region
    $region26: #{standard_mlp_forward.1} parent=1 // pred_check
      _
    $region27: #{standard_mlp_forward.1} parent=1 // pred_check_branch
      %48 = sbr.rel (0) target = $region29
    $region28: #{standard_mlp_forward.1} parent=1 // pred_region
      _
    $region29: #{standard_mlp_forward.1} parent=1 // pred_fallthru
      _
    // Predicated region
    $region30: #{standard_mlp_forward.1} parent=1 // pred_check
      _
    $region31: #{standard_mlp_forward.1} parent=1 // pred_check_branch
      %50 = sbr.rel (0) target = $region33
    $region32: #{standard_mlp_forward.1} parent=1 // pred_region
      %51 = dma.done [#allocation3], 16384
    $region33: #{standard_mlp_forward.1} parent=1 // pred_fallthru
      _
    // Predicated region
    $region34: #{standard_mlp_forward.1} parent=1 // pred_check
      _
    $region35: #{standard_mlp_forward.1} parent=1 // pred_check_branch
      %53 = sbr.rel (0) target = $region37
    $region36: #{standard_mlp_forward.1} parent=1 // pred_region
      %54 = dma.done [#allocation6], 2048
    $region37: #{standard_mlp_forward.1} parent=1 // pred_fallthru
      _
    %v55 = vld [vmem:[%s0] sm:$0xff]
    %v56 = vld [vmem:[%s0 + $0x8] sm:$0xff]
    %v57 = vld [vmem:[#allocation2] sm:$0xff]
    %v58 = vld [vmem:[#allocation2 + $0x8] sm:$0xff]
    %v59 = vld [vmem:[#allocation2 + $0x10] sm:$0xff]
    %v60 = vld [vmem:[#allocation2 + $0x18] sm:$0xff]
    %v61 = vld [vmem:[#allocation2 + $0x20] sm:$0xff]
    %v62 = vld [vmem:[#allocation2 + $0x28] sm:$0xff]
    %v63 = vld [vmem:[#allocation2 + $0x30] sm:$0xff]
    %v64 = vld [vmem:[#allocation2 + $0x38] sm:$0xff]
    %v65 = vld [vmem:[#allocation2 + $0x40] sm:$0xff]
    %v66 = vld [vmem:[#allocation2 + $0x48] sm:$0xff]
    %v67 = vld [vmem:[#allocation2 + $0x50] sm:$0xff]
    %v68 = vld [vmem:[#allocation2 + $0x58] sm:$0xff]
    %v69 = vld [vmem:[#allocation2 + $0x60] sm:$0xff]
    %v70 = vld [vmem:[#allocation2 + $0x68] sm:$0xff]
    %v71 = vld [vmem:[#allocation2 + $0x70] sm:$0xff]
    %v72 = vld [vmem:[#allocation2 + $0x78] sm:$0xff]
    %v73 = vld [vmem:[#allocation2 + $0x80] sm:$0xff]
    %v74 = vld [vmem:[#allocation2 + $0x88] sm:$0xff]
    %v75 = vld [vmem:[#allocation2 + $0x90] sm:$0xff]
    %v76 = vld [vmem:[#allocation2 + $0x98] sm:$0xff]
    %v77 = vld [vmem:[#allocation2 + $0xa0] sm:$0xff]
    %v78 = vld [vmem:[#allocation2 + $0xa8] sm:$0xff]
    %v79 = vld [vmem:[#allocation2 + $0xb0] sm:$0xff]
    %v80 = vld [vmem:[#allocation2 + $0xb8] sm:$0xff]
    %v81 = vld [vmem:[#allocation2 + $0xc0] sm:$0xff]
    %v82 = vld [vmem:[#allocation2 + $0xc8] sm:$0xff]
    %v83 = vld [vmem:[#allocation2 + $0xd0] sm:$0xff]
    %v84 = vld [vmem:[#allocation2 + $0xd8] sm:$0xff]
    %v85 = vld [vmem:[#allocation2 + $0xe0] sm:$0xff]
    %v86 = vld [vmem:[#allocation2 + $0xe8] sm:$0xff]
    %v87 = vld [vmem:[#allocation2 + $0xf0] sm:$0xff]
    %v88 = vld [vmem:[#allocation2 + $0xf8] sm:$0xff]
    %v89 = vld [vmem:[#allocation2 + $0x100] sm:$0xff]
    %v90 = vld [vmem:[#allocation2 + $0x108] sm:$0xff]
    %v91 = vld [vmem:[#allocation2 + $0x110] sm:$0xff]
    %v92 = vld [vmem:[#allocation2 + $0x118] sm:$0xff]
    %v93 = vld [vmem:[#allocation2 + $0x120] sm:$0xff]
    %v94 = vld [vmem:[#allocation2 + $0x128] sm:$0xff]
    %v95 = vld [vmem:[#allocation2 + $0x130] sm:$0xff]
    %v96 = vld [vmem:[#allocation2 + $0x138] sm:$0xff]
    %v97 = vld [vmem:[#allocation2 + $0x140] sm:$0xff]
    %v98 = vld [vmem:[#allocation2 + $0x148] sm:$0xff]
    %v99 = vld [vmem:[#allocation2 + $0x150] sm:$0xff]
    %v100 = vld [vmem:[#allocation2 + $0x158] sm:$0xff]
    %v101 = vld [vmem:[#allocation2 + $0x160] sm:$0xff]
    %v102 = vld [vmem:[#allocation2 + $0x168] sm:$0xff]
    %v103 = vld [vmem:[#allocation2 + $0x170] sm:$0xff]
    %v104 = vld [vmem:[#allocation2 + $0x178] sm:$0xff]
    %v105 = vld [vmem:[#allocation2 + $0x180] sm:$0xff]
    %v106 = vld [vmem:[#allocation2 + $0x188] sm:$0xff]
    %v107 = vld [vmem:[#allocation2 + $0x190] sm:$0xff]
    %v108 = vld [vmem:[#allocation2 + $0x198] sm:$0xff]
    %v109 = vld [vmem:[#allocation2 + $0x1a0] sm:$0xff]
    %v110 = vld [vmem:[#allocation2 + $0x1a8] sm:$0xff]
    %v111 = vld [vmem:[#allocation2 + $0x1b0] sm:$0xff]
    %v112 = vld [vmem:[#allocation2 + $0x1b8] sm:$0xff]
    %v113 = vld [vmem:[#allocation2 + $0x1c0] sm:$0xff]
    %v114 = vld [vmem:[#allocation2 + $0x1c8] sm:$0xff]
    %v115 = vld [vmem:[#allocation2 + $0x1d0] sm:$0xff]
    %v116 = vld [vmem:[#allocation2 + $0x1d8] sm:$0xff]
    %v117 = vld [vmem:[#allocation2 + $0x1e0] sm:$0xff]
    %v118 = vld [vmem:[#allocation2 + $0x1e8] sm:$0xff]
    %v119 = vld [vmem:[#allocation2 + $0x1f0] sm:$0xff]
    %v120 = vld [vmem:[#allocation2 + $0x1f8] sm:$0xff]
    %v121 = vld [vmem:[#allocation2 + $0x200] sm:$0xff]
    %v122 = vld [vmem:[#allocation2 + $0x208] sm:$0xff]
    %v123 = vld [vmem:[#allocation2 + $0x210] sm:$0xff]
    %v124 = vld [vmem:[#allocation2 + $0x218] sm:$0xff]
    %v125 = vld [vmem:[#allocation2 + $0x220] sm:$0xff]
    %v126 = vld [vmem:[#allocation2 + $0x228] sm:$0xff]
    %v127 = vld [vmem:[#allocation2 + $0x230] sm:$0xff]
    %v128 = vld [vmem:[#allocation2 + $0x238] sm:$0xff]
    %v129 = vld [vmem:[#allocation2 + $0x240] sm:$0xff]
    %v130 = vld [vmem:[#allocation2 + $0x248] sm:$0xff]
    %v131 = vld [vmem:[#allocation2 + $0x250] sm:$0xff]
    %v132 = vld [vmem:[#allocation2 + $0x258] sm:$0xff]
    %v133 = vld [vmem:[#allocation2 + $0x260] sm:$0xff]
    %v134 = vld [vmem:[#allocation2 + $0x268] sm:$0xff]
    %v135 = vld [vmem:[#allocation2 + $0x270] sm:$0xff]
    %v136 = vld [vmem:[#allocation2 + $0x278] sm:$0xff]
    %v137 = vld [vmem:[#allocation2 + $0x280] sm:$0xff]
    %v138 = vld [vmem:[#allocation2 + $0x288] sm:$0xff]
    %v139 = vld [vmem:[#allocation2 + $0x290] sm:$0xff]
    %v140 = vld [vmem:[#allocation2 + $0x298] sm:$0xff]
    %v141 = vld [vmem:[#allocation2 + $0x2a0] sm:$0xff]
    %v142 = vld [vmem:[#allocation2 + $0x2a8] sm:$0xff]
    %v143 = vld [vmem:[#allocation2 + $0x2b0] sm:$0xff]
    %v144 = vld [vmem:[#allocation2 + $0x2b8] sm:$0xff]
    %v145 = vld [vmem:[#allocation2 + $0x2c0] sm:$0xff]
    %v146 = vld [vmem:[#allocation2 + $0x2c8] sm:$0xff]
    %v147 = vld [vmem:[#allocation2 + $0x2d0] sm:$0xff]
    %v148 = vld [vmem:[#allocation2 + $0x2d8] sm:$0xff]
    %v149 = vld [vmem:[#allocation2 + $0x2e0] sm:$0xff]
    %v150 = vld [vmem:[#allocation2 + $0x2e8] sm:$0xff]
    %v151 = vld [vmem:[#allocation2 + $0x2f0] sm:$0xff]
    %v152 = vld [vmem:[#allocation2 + $0x2f8] sm:$0xff]
    %v153 = vld [vmem:[#allocation2 + $0x300] sm:$0xff]
    %v154 = vld [vmem:[#allocation2 + $0x308] sm:$0xff]
    %v155 = vld [vmem:[#allocation2 + $0x310] sm:$0xff]
    %v156 = vld [vmem:[#allocation2 + $0x318] sm:$0xff]
    %v157 = vld [vmem:[#allocation2 + $0x320] sm:$0xff]
    %v158 = vld [vmem:[#allocation2 + $0x328] sm:$0xff]
    %v159 = vld [vmem:[#allocation2 + $0x330] sm:$0xff]
    %v160 = vld [vmem:[#allocation2 + $0x338] sm:$0xff]
    %v161 = vld [vmem:[#allocation2 + $0x340] sm:$0xff]
    %v162 = vld [vmem:[#allocation2 + $0x348] sm:$0xff]
    %v163 = vld [vmem:[#allocation2 + $0x350] sm:$0xff]
    %v164 = vld [vmem:[#allocation2 + $0x358] sm:$0xff]
    %v165 = vld [vmem:[#allocation2 + $0x360] sm:$0xff]
    %v166 = vld [vmem:[#allocation2 + $0x368] sm:$0xff]
    %v167 = vld [vmem:[#allocation2 + $0x370] sm:$0xff]
    %v168 = vld [vmem:[#allocation2 + $0x378] sm:$0xff]
    %v169 = vld [vmem:[#allocation2 + $0x380] sm:$0xff]
    %v170 = vld [vmem:[#allocation2 + $0x388] sm:$0xff]
    %v171 = vld [vmem:[#allocation2 + $0x390] sm:$0xff]
    %v172 = vld [vmem:[#allocation2 + $0x398] sm:$0xff]
    %v173 = vld [vmem:[#allocation2 + $0x3a0] sm:$0xff]
    %v174 = vld [vmem:[#allocation2 + $0x3a8] sm:$0xff]
    %v175 = vld [vmem:[#allocation2 + $0x3b0] sm:$0xff]
    %v176 = vld [vmem:[#allocation2 + $0x3b8] sm:$0xff]
    %v177 = vld [vmem:[#allocation2 + $0x3c0] sm:$0xff]
    %v178 = vld [vmem:[#allocation2 + $0x3c8] sm:$0xff]
    %v179 = vld [vmem:[#allocation2 + $0x3d0] sm:$0xff]
    %v180 = vld [vmem:[#allocation2 + $0x3d8] sm:$0xff]
    %v181 = vld [vmem:[#allocation2 + $0x3e0] sm:$0xff]
    %v182 = vld [vmem:[#allocation2 + $0x3e8] sm:$0xff]
    %v183 = vld [vmem:[#allocation2 + $0x3f0] sm:$0xff]
    %v184 = vld [vmem:[#allocation2 + $0x3f8] sm:$0xff]
    %v185 = vld [vmem:[%s2] sm:$0x1]
    %v187 = vlaneseq
    %v188 = vshrl.u32 %v187, 7
    %v189 = vsub.s32 0, %v188
    %v190 = vrot.slane %v185, %v189
    %v194 = vcombine.high %v55, %v55
    %v196 = vunpack.c.l.s4 1983009808
    %v197 = vunpack.c.0.s8 %v196
    %v198 = vlaneseq
    %v199 = vshrl.u32 %v198, 7
    %v200 = vsub.s32 %v197, %v199
    %v201 = vrot.slane %v55, %v200
    %v203 = vunpack.c.l.s4 1983009808
    %v204 = vunpack.c.0.s8 %v203
    %v205 = vlaneseq
    %v206 = vshrl.u32 %v205, 7
    %v207 = vsub.s32 %v204, %v206
    %v208 = vrot.slane %v194, %v207
    %v209 = vcombine.high %v201, %v201
    %v210 = vcombine.high %v208, %v208
    %v211 = vcombine.high %v56, %v56
    %v213 = vunpack.c.l.s4 1983009808
    %v214 = vunpack.c.0.s8 %v213
    %v215 = vlaneseq
    %v216 = vshrl.u32 %v215, 7
    %v217 = vsub.s32 %v214, %v216
    %v218 = vrot.slane %v56, %v217
    %v220 = vunpack.c.l.s4 1983009808
    %v221 = vunpack.c.0.s8 %v220
    %v222 = vlaneseq
    %v223 = vshrl.u32 %v222, 7
    %v224 = vsub.s32 %v221, %v223
    %v225 = vrot.slane %v211, %v224
    %v226 = vcombine.high %v218, %v218
    %v227 = vcombine.high %v225, %v225
    %236 = vmatprep.subr.mxu0 0.0
    %237 = vmatpush1.msra.mxu0 %v57
    %238 = vmatprep.subr.mxu0 0.0
    %239 = vmatpush1.msra.mxu0 %v58
    %240 = vmatprep.subr.mxu0 0.0
    %241 = vmatpush1.msra.mxu0 %v59
    %242 = vmatprep.subr.mxu0 0.0
    %243 = vmatpush1.msra.mxu0 %v60
    %244 = vmatprep.subr.mxu0 0.0
    %245 = vmatpush1.msra.mxu0 %v61
    %246 = vmatprep.subr.mxu0 0.0
    %247 = vmatpush1.msra.mxu0 %v62
    %248 = vmatprep.subr.mxu0 0.0
    %249 = vmatpush1.msra.mxu0 %v63
    %250 = vmatprep.subr.mxu0 0.0
    %251 = vmatpush1.msra.mxu0 %v64
    %252 = vmatprep.subr.mxu0 0.0
    %253 = vmatpush1.msra.mxu0 %v65
    %254 = vmatprep.subr.mxu0 0.0
    %255 = vmatpush1.msra.mxu0 %v66
    %256 = vmatprep.subr.mxu0 0.0
    %257 = vmatpush1.msra.mxu0 %v67
    %258 = vmatprep.subr.mxu0 0.0
    %259 = vmatpush1.msra.mxu0 %v68
    %260 = vmatprep.subr.mxu0 0.0
    %261 = vmatpush1.msra.mxu0 %v69
    %262 = vmatprep.subr.mxu0 0.0
    %263 = vmatpush1.msra.mxu0 %v70
    %264 = vmatprep.subr.mxu0 0.0
    %265 = vmatpush1.msra.mxu0 %v71
    %266 = vmatprep.subr.mxu0 0.0
    %267 = vmatpush1.msra.mxu0 %v72
    %268 = vmatprep.subr.mxu0 0.0
    %269 = vmatpush1.msra.mxu0 %v73
    %270 = vmatprep.subr.mxu0 0.0
    %271 = vmatpush1.msra.mxu0 %v74
    %272 = vmatprep.subr.mxu0 0.0
    %273 = vmatpush1.msra.mxu0 %v75
    %274 = vmatprep.subr.mxu0 0.0
    %275 = vmatpush1.msra.mxu0 %v76
    %276 = vmatprep.subr.mxu0 0.0
    %277 = vmatpush1.msra.mxu0 %v77
    %278 = vmatprep.subr.mxu0 0.0
    %279 = vmatpush1.msra.mxu0 %v78
    %280 = vmatprep.subr.mxu0 0.0
    %281 = vmatpush1.msra.mxu0 %v79
    %282 = vmatprep.subr.mxu0 0.0
    %283 = vmatpush1.msra.mxu0 %v80
    %284 = vmatprep.subr.mxu0 0.0
    %285 = vmatpush1.msra.mxu0 %v81
    %286 = vmatprep.subr.mxu0 0.0
    %287 = vmatpush1.msra.mxu0 %v82
    %288 = vmatprep.subr.mxu0 0.0
    %289 = vmatpush1.msra.mxu0 %v83
    %290 = vmatprep.subr.mxu0 0.0
    %291 = vmatpush1.msra.mxu0 %v84
    %292 = vmatprep.subr.mxu0 0.0
    %293 = vmatpush1.msra.mxu0 %v85
    %294 = vmatprep.subr.mxu0 0.0
    %295 = vmatpush1.msra.mxu0 %v86
    %296 = vmatprep.subr.mxu0 0.0
    %297 = vmatpush1.msra.mxu0 %v87
    %298 = vmatprep.subr.mxu0 0.0
    %299 = vmatpush1.msra.mxu0 %v88
    %300 = vmatprep.mubr.f32.mxu0 %v209
    %301 = vmatmul.mubr.f32.gmra.mrb[0].mxu0 %v201
    %v302 = vpop.f32.mrb[0].mxu0
    %v303 = vadd.f32 %v190, %v302
    %v304 = vpop.f32.mrb[0].mxu0
    %305 = vdwg.mxu0
    %306 = vmatprep.subr.mxu0 0.0
    %307 = vmatpush1.msra.mxu0 %v89
    %308 = vmatprep.subr.mxu0 0.0
    %309 = vmatpush1.msra.mxu0 %v90
    %310 = vmatprep.subr.mxu0 0.0
    %311 = vmatpush1.msra.mxu0 %v91
    %312 = vmatprep.subr.mxu0 0.0
    %313 = vmatpush1.msra.mxu0 %v92
    %314 = vmatprep.subr.mxu0 0.0
    %315 = vmatpush1.msra.mxu0 %v93
    %316 = vmatprep.subr.mxu0 0.0
    %317 = vmatpush1.msra.mxu0 %v94
    %318 = vmatprep.subr.mxu0 0.0
    %319 = vmatpush1.msra.mxu0 %v95
    %320 = vmatprep.subr.mxu0 0.0
    %321 = vmatpush1.msra.mxu0 %v96
    %322 = vmatprep.subr.mxu0 0.0
    %323 = vmatpush1.msra.mxu0 %v97
    %324 = vmatprep.subr.mxu0 0.0
    %325 = vmatpush1.msra.mxu0 %v98
    %326 = vmatprep.subr.mxu0 0.0
    %327 = vmatpush1.msra.mxu0 %v99
    %328 = vmatprep.subr.mxu0 0.0
    %329 = vmatpush1.msra.mxu0 %v100
    %330 = vmatprep.subr.mxu0 0.0
    %331 = vmatpush1.msra.mxu0 %v101
    %332 = vmatprep.subr.mxu0 0.0
    %333 = vmatpush1.msra.mxu0 %v102
    %334 = vmatprep.subr.mxu0 0.0
    %335 = vmatpush1.msra.mxu0 %v103
    %336 = vmatprep.subr.mxu0 0.0
    %337 = vmatpush1.msra.mxu0 %v104
    %338 = vmatprep.subr.mxu0 0.0
    %339 = vmatpush1.msra.mxu0 %v105
    %340 = vmatprep.subr.mxu0 0.0
    %341 = vmatpush1.msra.mxu0 %v106
    %342 = vmatprep.subr.mxu0 0.0
    %343 = vmatpush1.msra.mxu0 %v107
    %344 = vmatprep.subr.mxu0 0.0
    %345 = vmatpush1.msra.mxu0 %v108
    %346 = vmatprep.subr.mxu0 0.0
    %347 = vmatpush1.msra.mxu0 %v109
    %348 = vmatprep.subr.mxu0 0.0
    %349 = vmatpush1.msra.mxu0 %v110
    %350 = vmatprep.subr.mxu0 0.0
    %351 = vmatpush1.msra.mxu0 %v111
    %352 = vmatprep.subr.mxu0 0.0
    %353 = vmatpush1.msra.mxu0 %v112
    %354 = vmatprep.subr.mxu0 0.0
    %355 = vmatpush1.msra.mxu0 %v113
    %356 = vmatprep.subr.mxu0 0.0
    %357 = vmatpush1.msra.mxu0 %v114
    %358 = vmatprep.subr.mxu0 0.0
    %359 = vmatpush1.msra.mxu0 %v115
    %360 = vmatprep.subr.mxu0 0.0
    %361 = vmatpush1.msra.mxu0 %v116
    %362 = vmatprep.subr.mxu0 0.0
    %363 = vmatpush1.msra.mxu0 %v117
    %364 = vmatprep.subr.mxu0 0.0
    %365 = vmatpush1.msra.mxu0 %v118
    %366 = vmatprep.subr.mxu0 0.0
    %367 = vmatpush1.msra.mxu0 %v119
    %368 = vmatprep.subr.mxu0 0.0
    %369 = vmatpush1.msra.mxu0 %v120
    %370 = vmatprep.mubr.f32.mxu0 %v210
    %371 = vmatmul.mubr.f32.gmra.mrb[0].mxu0 %v208
    %v372 = vpop.f32.mrb[0].mxu0
    %v373 = vadd.f32 %v303, %v372
    %v374 = vpop.f32.mrb[0].mxu0
    %375 = vdwg.mxu0
    %376 = vmatprep.subr.mxu0 0.0
    %377 = vmatpush1.msra.mxu0 %v121
    %378 = vmatprep.subr.mxu0 0.0
    %379 = vmatpush1.msra.mxu0 %v122
    %380 = vmatprep.subr.mxu0 0.0
    %381 = vmatpush1.msra.mxu0 %v123
    %382 = vmatprep.subr.mxu0 0.0
    %383 = vmatpush1.msra.mxu0 %v124
    %384 = vmatprep.subr.mxu0 0.0
    %385 = vmatpush1.msra.mxu0 %v125
    %386 = vmatprep.subr.mxu0 0.0
    %387 = vmatpush1.msra.mxu0 %v126
    %388 = vmatprep.subr.mxu0 0.0
    %389 = vmatpush1.msra.mxu0 %v127
    %390 = vmatprep.subr.mxu0 0.0
    %391 = vmatpush1.msra.mxu0 %v128
    %392 = vmatprep.subr.mxu0 0.0
    %393 = vmatpush1.msra.mxu0 %v129
    %394 = vmatprep.subr.mxu0 0.0
    %395 = vmatpush1.msra.mxu0 %v130
    %396 = vmatprep.subr.mxu0 0.0
    %397 = vmatpush1.msra.mxu0 %v131
    %398 = vmatprep.subr.mxu0 0.0
    %399 = vmatpush1.msra.mxu0 %v132
    %400 = vmatprep.subr.mxu0 0.0
    %401 = vmatpush1.msra.mxu0 %v133
    %402 = vmatprep.subr.mxu0 0.0
    %403 = vmatpush1.msra.mxu0 %v134
    %404 = vmatprep.subr.mxu0 0.0
    %405 = vmatpush1.msra.mxu0 %v135
    %406 = vmatprep.subr.mxu0 0.0
    %407 = vmatpush1.msra.mxu0 %v136
    %408 = vmatprep.subr.mxu0 0.0
    %409 = vmatpush1.msra.mxu0 %v137
    %410 = vmatprep.subr.mxu0 0.0
    %411 = vmatpush1.msra.mxu0 %v138
    %412 = vmatprep.subr.mxu0 0.0
    %413 = vmatpush1.msra.mxu0 %v139
    %414 = vmatprep.subr.mxu0 0.0
    %415 = vmatpush1.msra.mxu0 %v140
    %416 = vmatprep.subr.mxu0 0.0
    %417 = vmatpush1.msra.mxu0 %v141
    %418 = vmatprep.subr.mxu0 0.0
    %419 = vmatpush1.msra.mxu0 %v142
    %420 = vmatprep.subr.mxu0 0.0
    %421 = vmatpush1.msra.mxu0 %v143
    %422 = vmatprep.subr.mxu0 0.0
    %423 = vmatpush1.msra.mxu0 %v144
    %424 = vmatprep.subr.mxu0 0.0
    %425 = vmatpush1.msra.mxu0 %v145
    %426 = vmatprep.subr.mxu0 0.0
    %427 = vmatpush1.msra.mxu0 %v146
    %428 = vmatprep.subr.mxu0 0.0
    %429 = vmatpush1.msra.mxu0 %v147
    %430 = vmatprep.subr.mxu0 0.0
    %431 = vmatpush1.msra.mxu0 %v148
    %432 = vmatprep.subr.mxu0 0.0
    %433 = vmatpush1.msra.mxu0 %v149
    %434 = vmatprep.subr.mxu0 0.0
    %435 = vmatpush1.msra.mxu0 %v150
    %436 = vmatprep.subr.mxu0 0.0
    %437 = vmatpush1.msra.mxu0 %v151
    %438 = vmatprep.subr.mxu0 0.0
    %439 = vmatpush1.msra.mxu0 %v152
    %440 = vmatprep.mubr.f32.mxu0 %v226
    %441 = vmatmul.mubr.f32.gmra.mrb[0].mxu0 %v218
    %v442 = vpop.f32.mrb[0].mxu0
    %v443 = vadd.f32 %v373, %v442
    %v444 = vpop.f32.mrb[0].mxu0
    %445 = vdwg.mxu0
    %446 = vmatprep.subr.mxu0 0.0
    %447 = vmatpush1.msra.mxu0 %v153
    %448 = vmatprep.subr.mxu0 0.0
    %449 = vmatpush1.msra.mxu0 %v154
    %450 = vmatprep.subr.mxu0 0.0
    %451 = vmatpush1.msra.mxu0 %v155
    %452 = vmatprep.subr.mxu0 0.0
    %453 = vmatpush1.msra.mxu0 %v156
    %454 = vmatprep.subr.mxu0 0.0
    %455 = vmatpush1.msra.mxu0 %v157
    %456 = vmatprep.subr.mxu0 0.0
    %457 = vmatpush1.msra.mxu0 %v158
    %458 = vmatprep.subr.mxu0 0.0
    %459 = vmatpush1.msra.mxu0 %v159
    %460 = vmatprep.subr.mxu0 0.0
    %461 = vmatpush1.msra.mxu0 %v160
    %462 = vmatprep.subr.mxu0 0.0
    %463 = vmatpush1.msra.mxu0 %v161
    %464 = vmatprep.subr.mxu0 0.0
    %465 = vmatpush1.msra.mxu0 %v162
    %466 = vmatprep.subr.mxu0 0.0
    %467 = vmatpush1.msra.mxu0 %v163
    %468 = vmatprep.subr.mxu0 0.0
    %469 = vmatpush1.msra.mxu0 %v164
    %470 = vmatprep.subr.mxu0 0.0
    %471 = vmatpush1.msra.mxu0 %v165
    %472 = vmatprep.subr.mxu0 0.0
    %473 = vmatpush1.msra.mxu0 %v166
    %474 = vmatprep.subr.mxu0 0.0
    %475 = vmatpush1.msra.mxu0 %v167
    %476 = vmatprep.subr.mxu0 0.0
    %477 = vmatpush1.msra.mxu0 %v168
    %478 = vmatprep.subr.mxu0 0.0
    %479 = vmatpush1.msra.mxu0 %v169
    %480 = vmatprep.subr.mxu0 0.0
    %481 = vmatpush1.msra.mxu0 %v170
    %482 = vmatprep.subr.mxu0 0.0
    %483 = vmatpush1.msra.mxu0 %v171
    %484 = vmatprep.subr.mxu0 0.0
    %485 = vmatpush1.msra.mxu0 %v172
    %486 = vmatprep.subr.mxu0 0.0
    %487 = vmatpush1.msra.mxu0 %v173
    %488 = vmatprep.subr.mxu0 0.0
    %489 = vmatpush1.msra.mxu0 %v174
    %490 = vmatprep.subr.mxu0 0.0
    %491 = vmatpush1.msra.mxu0 %v175
    %492 = vmatprep.subr.mxu0 0.0
    %493 = vmatpush1.msra.mxu0 %v176
    %494 = vmatprep.subr.mxu0 0.0
    %495 = vmatpush1.msra.mxu0 %v177
    %496 = vmatprep.subr.mxu0 0.0
    %497 = vmatpush1.msra.mxu0 %v178
    %498 = vmatprep.subr.mxu0 0.0
    %499 = vmatpush1.msra.mxu0 %v179
    %500 = vmatprep.subr.mxu0 0.0
    %501 = vmatpush1.msra.mxu0 %v180
    %502 = vmatprep.subr.mxu0 0.0
    %503 = vmatpush1.msra.mxu0 %v181
    %504 = vmatprep.subr.mxu0 0.0
    %505 = vmatpush1.msra.mxu0 %v182
    %506 = vmatprep.subr.mxu0 0.0
    %507 = vmatpush1.msra.mxu0 %v183
    %508 = vmatprep.subr.mxu0 0.0
    %509 = vmatpush1.msra.mxu0 %v184
    %510 = vmatprep.mubr.f32.mxu0 %v227
    %511 = vmatmul.mubr.f32.gmra.mrb[0].mxu0 %v225
    %v512 = vpop.f32.mrb[0].mxu0
    %v513 = vadd.f32 %v443, %v512
    %v514 = vpop.f32.mrb[0].mxu0
    %515 = vdwg.mxu0
    %v516 = vmax.f32 %v513, 0.0
    %v517 = vld [vmem:[%s3] sm:$0xff]
    %v518 = vld [vmem:[%s3 + $0x8] sm:$0xff]
    %v519 = vld [vmem:[%s3 + $0x10] sm:$0xff]
    %v520 = vld [vmem:[%s3 + $0x18] sm:$0xff]
    %v521 = vld [vmem:[%s3 + $0x20] sm:$0xff]
    %v522 = vld [vmem:[%s3 + $0x28] sm:$0xff]
    %v523 = vld [vmem:[%s3 + $0x30] sm:$0xff]
    %v524 = vld [vmem:[%s3 + $0x38] sm:$0xff]
    %v525 = vld [vmem:[%s3 + $0x40] sm:$0xff]
    %v526 = vld [vmem:[%s3 + $0x48] sm:$0xff]
    %v527 = vld [vmem:[%s3 + $0x50] sm:$0xff]
    %v528 = vld [vmem:[%s3 + $0x58] sm:$0xff]
    %v529 = vld [vmem:[%s3 + $0x60] sm:$0xff]
    %v530 = vld [vmem:[%s3 + $0x68] sm:$0xff]
    %v531 = vld [vmem:[%s3 + $0x70] sm:$0xff]
    %v532 = vld [vmem:[%s3 + $0x78] sm:$0xff]
    %v533 = vld [vmem:[%s4] sm:$0x1]
    %v535 = vlaneseq
    %v536 = vshrl.u32 %v535, 7
    %v537 = vsub.s32 0, %v536
    %v538 = vrot.slane %v533, %v537
    %540 = vmatprep.subr.mxu0 0.0
    %541 = vmatpush1.msra.mxu0 %v517
    %542 = vmatprep.subr.mxu0 0.0
    %543 = vmatpush1.msra.mxu0 %v518
    %544 = vmatprep.subr.mxu0 0.0
    %545 = vmatpush1.msra.mxu0 %v519
    %546 = vmatprep.subr.mxu0 0.0
    %547 = vmatpush1.msra.mxu0 %v520
    %548 = vmatprep.subr.mxu0 0.0
    %549 = vmatpush1.msra.mxu0 %v521
    %550 = vmatprep.subr.mxu0 0.0
    %551 = vmatpush1.msra.mxu0 %v522
    %552 = vmatprep.subr.mxu0 0.0
    %553 = vmatpush1.msra.mxu0 %v523
    %554 = vmatprep.subr.mxu0 0.0
    %555 = vmatpush1.msra.mxu0 %v524
    %556 = vmatprep.subr.mxu0 0.0
    %557 = vmatpush1.msra.mxu0 %v525
    %558 = vmatprep.subr.mxu0 0.0
    %559 = vmatpush1.msra.mxu0 %v526
    %560 = vmatprep.subr.mxu0 0.0
    %561 = vmatpush1.msra.mxu0 %v527
    %562 = vmatprep.subr.mxu0 0.0
    %563 = vmatpush1.msra.mxu0 %v528
    %564 = vmatprep.subr.mxu0 0.0
    %565 = vmatpush1.msra.mxu0 %v529
    %566 = vmatprep.subr.mxu0 0.0
    %567 = vmatpush1.msra.mxu0 %v530
    %568 = vmatprep.subr.mxu0 0.0
    %569 = vmatpush1.msra.mxu0 %v531
    %570 = vmatprep.subr.mxu0 0.0
    %571 = vmatpush1.msra.mxu0 %v532
    %572 = vmatprep.subr.mxu0 0.0
    %573 = vmatpush1.msra.mxu0 0.0
    %574 = vmatprep.subr.mxu0 0.0
    %575 = vmatpush1.msra.mxu0 0.0
    %576 = vmatprep.subr.mxu0 0.0
    %577 = vmatpush1.msra.mxu0 0.0
    %578 = vmatprep.subr.mxu0 0.0
    %579 = vmatpush1.msra.mxu0 0.0
    %580 = vmatprep.subr.mxu0 0.0
    %581 = vmatpush1.msra.mxu0 0.0
    %582 = vmatprep.subr.mxu0 0.0
    %583 = vmatpush1.msra.mxu0 0.0
    %584 = vmatprep.subr.mxu0 0.0
    %585 = vmatpush1.msra.mxu0 0.0
    %586 = vmatprep.subr.mxu0 0.0
    %587 = vmatpush1.msra.mxu0 0.0
    %588 = vmatprep.subr.mxu0 0.0
    %589 = vmatpush1.msra.mxu0 0.0
    %590 = vmatprep.subr.mxu0 0.0
    %591 = vmatpush1.msra.mxu0 0.0
    %592 = vmatprep.subr.mxu0 0.0
    %593 = vmatpush1.msra.mxu0 0.0
    %594 = vmatprep.subr.mxu0 0.0
    %595 = vmatpush1.msra.mxu0 0.0
    %596 = vmatprep.subr.mxu0 0.0
    %597 = vmatpush1.msra.mxu0 0.0
    %598 = vmatprep.subr.mxu0 0.0
    %599 = vmatpush1.msra.mxu0 0.0
    %600 = vmatprep.subr.mxu0 0.0
    %601 = vmatpush1.msra.mxu0 0.0
    %602 = vmatprep.subr.mxu0 0.0
    %603 = vmatpush1.msra.mxu0 0.0
    %604 = vmatprep.mubr.f32.mxu0 0.0
    %605 = vmatmul.mubr.f32.gmra.mrb[0].mxu0 %v516
    %v606 = vpop.f32.mrb[0].mxu0
    %v607 = vadd.f32 %v538, %v606
    %v608 = vpop.f32.mrb[0].mxu0
    %609 = vdwg.mxu0
    %v610 = vmax.f32 %v607, 0.0
    %v611 = vld [vmem:[#allocation5] sm:$0xff]
    %v612 = vld [vmem:[#allocation5 + $0x8] sm:$0xff]
    %v613 = vld [vmem:[#allocation5 + $0x10] sm:$0xff]
    %v614 = vld [vmem:[#allocation5 + $0x18] sm:$0xff]
    %v615 = vld [vmem:[#allocation5 + $0x20] sm:$0xff]
    %v616 = vld [vmem:[#allocation5 + $0x28] sm:$0xff]
    %v617 = vld [vmem:[#allocation5 + $0x30] sm:$0xff]
    %v618 = vld [vmem:[#allocation5 + $0x38] sm:$0xff]
    %v619 = vld [vmem:[#allocation5 + $0x40] sm:$0xff]
    %v620 = vld [vmem:[#allocation5 + $0x48] sm:$0xff]
    %v621 = vld [vmem:[#allocation5 + $0x50] sm:$0xff]
    %v622 = vld [vmem:[#allocation5 + $0x58] sm:$0xff]
    %v623 = vld [vmem:[#allocation5 + $0x60] sm:$0xff]
    %v624 = vld [vmem:[#allocation5 + $0x68] sm:$0xff]
    %v625 = vld [vmem:[#allocation5 + $0x70] sm:$0xff]
    %v626 = vld [vmem:[#allocation5 + $0x78] sm:$0xff]
    %v627 = vld [vmem:[%s6] sm:$0x1]
    %v629 = vlaneseq
    %v630 = vshrl.u32 %v629, 7
    %v631 = vsub.s32 0, %v630
    %v632 = vrot.slane %v627, %v631
    %634 = vmatprep.subr.mxu0 0.0
    %635 = vmatpush1.msra.mxu0 %v611
    %636 = vmatprep.subr.mxu0 0.0
    %637 = vmatpush1.msra.mxu0 %v612
    %638 = vmatprep.subr.mxu0 0.0
    %639 = vmatpush1.msra.mxu0 %v613
    %640 = vmatprep.subr.mxu0 0.0
    %641 = vmatpush1.msra.mxu0 %v614
    %642 = vmatprep.subr.mxu0 0.0
    %643 = vmatpush1.msra.mxu0 %v615
    %644 = vmatprep.subr.mxu0 0.0
    %645 = vmatpush1.msra.mxu0 %v616
    %646 = vmatprep.subr.mxu0 0.0
    %647 = vmatpush1.msra.mxu0 %v617
    %648 = vmatprep.subr.mxu0 0.0
    %649 = vmatpush1.msra.mxu0 %v618
    %650 = vmatprep.subr.mxu0 0.0
    %651 = vmatpush1.msra.mxu0 %v619
    %652 = vmatprep.subr.mxu0 0.0
    %653 = vmatpush1.msra.mxu0 %v620
    %654 = vmatprep.subr.mxu0 0.0
    %655 = vmatpush1.msra.mxu0 %v621
    %656 = vmatprep.subr.mxu0 0.0
    %657 = vmatpush1.msra.mxu0 %v622
    %658 = vmatprep.subr.mxu0 0.0
    %659 = vmatpush1.msra.mxu0 %v623
    %660 = vmatprep.subr.mxu0 0.0
    %661 = vmatpush1.msra.mxu0 %v624
    %662 = vmatprep.subr.mxu0 0.0
    %663 = vmatpush1.msra.mxu0 %v625
    %664 = vmatprep.subr.mxu0 0.0
    %665 = vmatpush1.msra.mxu0 %v626
    %666 = vmatprep.subr.mxu0 0.0
    %667 = vmatpush1.msra.mxu0 0.0
    %668 = vmatprep.subr.mxu0 0.0
    %669 = vmatpush1.msra.mxu0 0.0
    %670 = vmatprep.subr.mxu0 0.0
    %671 = vmatpush1.msra.mxu0 0.0
    %672 = vmatprep.subr.mxu0 0.0
    %673 = vmatpush1.msra.mxu0 0.0
    %674 = vmatprep.subr.mxu0 0.0
    %675 = vmatpush1.msra.mxu0 0.0
    %676 = vmatprep.subr.mxu0 0.0
    %677 = vmatpush1.msra.mxu0 0.0
    %678 = vmatprep.subr.mxu0 0.0
    %679 = vmatpush1.msra.mxu0 0.0
    %680 = vmatprep.subr.mxu0 0.0
    %681 = vmatpush1.msra.mxu0 0.0
    %682 = vmatprep.subr.mxu0 0.0
    %683 = vmatpush1.msra.mxu0 0.0
    %684 = vmatprep.subr.mxu0 0.0
    %685 = vmatpush1.msra.mxu0 0.0
    %686 = vmatprep.subr.mxu0 0.0
    %687 = vmatpush1.msra.mxu0 0.0
    %688 = vmatprep.subr.mxu0 0.0
    %689 = vmatpush1.msra.mxu0 0.0
    %690 = vmatprep.subr.mxu0 0.0
    %691 = vmatpush1.msra.mxu0 0.0
    %692 = vmatprep.subr.mxu0 0.0
    %693 = vmatpush1.msra.mxu0 0.0
    %694 = vmatprep.subr.mxu0 0.0
    %695 = vmatpush1.msra.mxu0 0.0
    %696 = vmatprep.subr.mxu0 0.0
    %697 = vmatpush1.msra.mxu0 0.0
    %698 = vmatprep.mubr.f32.mxu0 0.0
    %699 = vmatmul.mubr.f32.gmra.mrb[0].mxu0 %v610
    %v700 = vpop.f32.mrb[0].mxu0
    %v701 = vadd.f32 %v632, %v700
    %v702 = vpop.f32.mrb[0].mxu0
    %703 = vdwg.mxu0
    %704 = vst [vmem:[#allocation7] sm:$0x3] %v701
    // Predicated region
    $region38: #{standard_mlp_forward.1} parent=1 // pred_check
      _
    $region39: #{standard_mlp_forward.1} parent=1 // pred_check_branch
      %706 = sbr.rel (0) target = $region41
    $region40: #{standard_mlp_forward.1} parent=1 // pred_region
      %s708 = ssub.s32 32, 32
      %709 = vsyncadd [#allocation4], %s708
      %s711 = sshll.u32 [#allocation7], 4
      %s712 = int_to_ptr.vmem [resolvable:$true] %s711
      %714 = dma.vmem_to_hbm [thread:$0]  %s712, 32, %s7, [#allocation4]
    $region41: #{standard_mlp_forward.1} parent=1 // pred_fallthru
      _
    // Predicated region
    $region42: #{standard_mlp_forward.1} parent=1 // pred_check
      _
    $region43: #{standard_mlp_forward.1} parent=1 // pred_check_branch
      %716 = sbr.rel (0) target = $region45
    $region44: #{standard_mlp_forward.1} parent=1 // pred_region
      %717 = dma.done [#allocation4], 32
    $region45: #{standard_mlp_forward.1} parent=1 // pred_fallthru
      _
    %718 = vsyncpa [#allocation3], 1
    %719 = vsyncpa [#allocation6], 1
    %720 = vsyncpa [#allocation4], 1

</llo_original>
